<compile_context>
chip_gen: v7x
topology: tpu7x:2x2x1
jax: 0.10.0
libtpu: 0.0.40
codegen_flags: <defaults>
</compile_context>

<pallas_src>
import functools
import math

import jax
import jax.numpy as jnp
from jax.experimental import pallas as pl
from jax.experimental.pallas import tpu as pltpu


# ----------------------------------------------------------------------------
# Tiling helpers
# ----------------------------------------------------------------------------

def _tile(dim, target):
    """Largest tile <= target that evenly divides dim (fallback: full dim)."""
    if dim <= target:
        return dim
    if dim % target == 0:
        return target
    return dim


# ----------------------------------------------------------------------------
# Dense: tiled MXU matmul with K-reduction accumulator and fused epilogue
# ----------------------------------------------------------------------------

def _dense_kernel(x_ref, w_ref, b_ref, o_ref, acc_ref, *, activation):
    @pl.when(pl.program_id(2) == 0)
    def _():
        acc_ref[...] = jnp.zeros_like(acc_ref)

    acc_ref[...] += jnp.dot(x_ref[...], w_ref[...],
                            preferred_element_type=jnp.float32)

    @pl.when(pl.program_id(2) == pl.num_programs(2) - 1)
    def _():
        y = acc_ref[...] + b_ref[...]                    # f32 epilogue
        if activation == "gelu":                         # BERT erf-based gelu
            y = 0.5 * y * (1.0 + jax.lax.erf(y * (1.0 / math.sqrt(2.0))))
        elif activation == "tanh":                       # pooler activation
            y = jnp.tanh(y)
        o_ref[...] = y.astype(o_ref.dtype)


def dense(x, w, b, activation=None, out_dtype=None,
          tm_target=256, tn_target=256, tk_target=512):
    """y = activation(x @ w + b); x: (M, K) bf16, w: (K, N) bf16, b: (N,) f32."""
    M, K = x.shape
    K2, N = w.shape
    assert K == K2
    out_dtype = out_dtype if out_dtype is not None else x.dtype
    tm = _tile(M, tm_target)
    tn = _tile(N, tn_target)
    tk = _tile(K, tk_target)
    b2 = b.reshape(1, N).astype(jnp.float32)
    grid = (M // tm, N // tn, K // tk)
    return pl.pallas_call(
        functools.partial(_dense_kernel, activation=activation),
        out_shape=jax.ShapeDtypeStruct((M, N), out_dtype),
        grid=grid,
        in_specs=[
            pl.BlockSpec((tm, tk), lambda i, j, k: (i, k)),
            pl.BlockSpec((tk, tn), lambda i, j, k: (k, j)),
            pl.BlockSpec((1, tn), lambda i, j, k: (0, j)),
        ],
        out_specs=pl.BlockSpec((tm, tn), lambda i, j, k: (i, j)),
        scratch_shapes=[pltpu.VMEM((tm, tn), jnp.float32)],
        compiler_params=pltpu.CompilerParams(
            dimension_semantics=("parallel", "parallel", "arbitrary"),
            vmem_limit_bytes=64 * 1024 * 1024),
    )(x, w, b2)


# ----------------------------------------------------------------------------
# LayerNorm (row tiled), with and without fused residual add
# ----------------------------------------------------------------------------

def _layernorm_body(x, g_ref, b_ref, o_ref, eps):
    mean = jnp.mean(x, axis=-1, keepdims=True)
    var = jnp.mean(jnp.square(x - mean), axis=-1, keepdims=True)
    y = (x - mean) * jax.lax.rsqrt(var + eps)
    y = y * g_ref[...].astype(jnp.float32) + b_ref[...].astype(jnp.float32)
    o_ref[...] = y.astype(o_ref.dtype)


def _layernorm_kernel(x_ref, g_ref, b_ref, o_ref, *, eps):
    _layernorm_body(x_ref[...].astype(jnp.float32), g_ref, b_ref, o_ref, eps)


def _add_layernorm_kernel(x_ref, r_ref, g_ref, b_ref, o_ref, *, eps):
    x = x_ref[...].astype(jnp.float32) + r_ref[...].astype(jnp.float32)
    _layernorm_body(x, g_ref, b_ref, o_ref, eps)


def layernorm(x, gamma, beta, eps=1e-12, out_dtype=None, tm_target=512):
    M, H = x.shape
    out_dtype = out_dtype if out_dtype is not None else x.dtype
    tm = _tile(M, tm_target)
    g2 = gamma.reshape(1, H)
    b2 = beta.reshape(1, H)
    return pl.pallas_call(
        functools.partial(_layernorm_kernel, eps=eps),
        out_shape=jax.ShapeDtypeStruct((M, H), out_dtype),
        grid=(M // tm,),
        in_specs=[
            pl.BlockSpec((tm, H), lambda i: (i, 0)),
            pl.BlockSpec((1, H), lambda i: (0, 0)),
            pl.BlockSpec((1, H), lambda i: (0, 0)),
        ],
        out_specs=pl.BlockSpec((tm, H), lambda i: (i, 0)),
        compiler_params=pltpu.CompilerParams(
            dimension_semantics=("parallel",)),
    )(x, g2, b2)


def add_layernorm(x, residual, gamma, beta, eps=1e-12, out_dtype=None,
                  tm_target=512):
    """LayerNorm(x + residual) with the residual add fused into the kernel."""
    M, H = x.shape
    out_dtype = out_dtype if out_dtype is not None else x.dtype
    tm = _tile(M, tm_target)
    g2 = gamma.reshape(1, H)
    b2 = beta.reshape(1, H)
    return pl.pallas_call(
        functools.partial(_add_layernorm_kernel, eps=eps),
        out_shape=jax.ShapeDtypeStruct((M, H), out_dtype),
        grid=(M // tm,),
        in_specs=[
            pl.BlockSpec((tm, H), lambda i: (i, 0)),
            pl.BlockSpec((tm, H), lambda i: (i, 0)),
            pl.BlockSpec((1, H), lambda i: (0, 0)),
            pl.BlockSpec((1, H), lambda i: (0, 0)),
        ],
        out_specs=pl.BlockSpec((tm, H), lambda i: (i, 0)),
        compiler_params=pltpu.CompilerParams(
            dimension_semantics=("parallel",)),
    )(x, residual, g2, b2)


# ----------------------------------------------------------------------------
# Multi-head attention: (B,) grid, (S, hidden) lane-dense blocks, heads looped
# inside the kernel (no split_heads transposes, no Dh-wide output stores).
# ----------------------------------------------------------------------------

def _attention_kernel(q_ref, k_ref, v_ref, bias_ref, o_ref, *,
                      n_heads, head_dim, scale):
    bias = bias_ref[0]                               # (1, S) f32 additive bias
    outs = []
    for h in range(n_heads):                         # static unroll (small n_heads)
        sl = pl.ds(h * head_dim, head_dim)
        q = q_ref[0, :, sl]                          # (S, Dh) bf16
        k = k_ref[0, :, sl]
        v = v_ref[0, :, sl]
        s = jax.lax.dot_general(q, k, (((1,), (1,)), ((), ())),
                                preferred_element_type=jnp.float32)
        s = s * scale + bias                         # BERT extended attention mask
        s = s - jnp.max(s, axis=-1, keepdims=True)
        p = jnp.exp(s)
        p = p * pl.reciprocal(jnp.sum(p, axis=-1, keepdims=True), approx=True)
        outs.append(jnp.dot(p.astype(v.dtype), v,
                            preferred_element_type=jnp.float32))
    o_ref[0] = jnp.concatenate(outs, axis=-1).astype(o_ref.dtype)


def multihead_attention(q, k, v, mask_bias, *, n_heads):
    """q,k,v: (B, S, hidden); mask_bias: (B, 1, S) f32. Returns (B, S, hidden)."""
    B, S, H = q.shape
    Dh = H // n_heads
    scale = 1.0 / math.sqrt(Dh)
    # TODO(synk): for S >= ~1-2K switch to a flash-style KV-tiled online softmax
    # to avoid materializing the full (S, S) score matrix per head.
    return pl.pallas_call(
        functools.partial(_attention_kernel, n_heads=n_heads,
                          head_dim=Dh, scale=scale),
        out_shape=jax.ShapeDtypeStruct((B, S, H), q.dtype),
        grid=(B,),
        in_specs=[
            pl.BlockSpec((1, S, H), lambda b: (b, 0, 0)),
            pl.BlockSpec((1, S, H), lambda b: (b, 0, 0)),
            pl.BlockSpec((1, S, H), lambda b: (b, 0, 0)),
            pl.BlockSpec((1, 1, S), lambda b: (b, 0, 0)),
        ],
        out_specs=pl.BlockSpec((1, S, H), lambda b: (b, 0, 0)),
        compiler_params=pltpu.CompilerParams(
            dimension_semantics=("parallel",)),
    )(q, k, v, mask_bias)


# ----------------------------------------------------------------------------
# Synthetic BERT parameters (deterministic init; no checkpoint loading)
# Matmul weights stored bf16 (MXU operands); biases / LN params kept f32.
# ----------------------------------------------------------------------------

def init_bert_params(key, *, vocab_size, hidden, n_layers, n_heads,
                     intermediate, max_pos, type_vocab=2):
    std = 0.02
    keys = jax.random.split(key, 5 + 10 * n_layers)
    ki = iter(keys)

    def nrm(shape, dtype=jnp.bfloat16):
        return (std * jax.random.normal(next(ki), shape)).astype(dtype)

    params = {
        "hidden": hidden,
        "n_heads": n_heads,
        "word_emb": nrm((vocab_size, hidden), jnp.float32),
        "pos_emb": nrm((max_pos, hidden), jnp.float32),
        "type_emb": nrm((type_vocab, hidden), jnp.float32),
        "emb_ln_g": jnp.ones((hidden,), jnp.float32),
        "emb_ln_b": jnp.zeros((hidden,), jnp.float32),
        "pool_w": nrm((hidden, hidden)),
        "pool_b": jnp.zeros((hidden,), jnp.float32),
        "layers": [],
    }
    for _ in range(n_layers):
        # Q/K/V fused into one (hidden, 3*hidden) projection.
        qkv_w = jnp.concatenate(
            [nrm((hidden, hidden)), nrm((hidden, hidden)), nrm((hidden, hidden))],
            axis=1)
        layer = {
            "qkv_w": qkv_w,
            "qkv_b": jnp.zeros((3 * hidden,), jnp.float32),
            "ao_w": nrm((hidden, hidden)),
            "ao_b": jnp.zeros((hidden,), jnp.float32),
            "ln1_g": jnp.ones((hidden,), jnp.float32),
            "ln1_b": jnp.zeros((hidden,), jnp.float32),
            "i_w": nrm((hidden, intermediate)),
            "i_b": jnp.zeros((intermediate,), jnp.float32),
            "o_w": nrm((intermediate, hidden)),
            "o_b": jnp.zeros((hidden,), jnp.float32),
            "ln2_g": jnp.ones((hidden,), jnp.float32),
            "ln2_b": jnp.zeros((hidden,), jnp.float32),
        }
        params["layers"].append(layer)
    return params


# ----------------------------------------------------------------------------
# BERT forward (embedding gather is glue; all heavy compute is in Pallas)
# ----------------------------------------------------------------------------

def bert_forward(params, input_ids, attention_mask):
    B, S = input_ids.shape
    H = params["hidden"]
    n_heads = params["n_heads"]
    cdt = jnp.bfloat16                                   # MXU operand dtype

    # Embedding lookup (gather) kept in plain JAX glue.
    emb = (params["word_emb"][input_ids]
           + params["pos_emb"][jnp.arange(S)][None, :, :]
           + params["type_emb"][0][None, None, :])
    h = layernorm(emb.reshape(B * S, H),
                  params["emb_ln_g"], params["emb_ln_b"], out_dtype=cdt)

    # Additive attention-mask bias, computed once per batch.
    mask_bias = ((1.0 - attention_mask.astype(jnp.float32))
                 * (-10000.0)).reshape(B, 1, S)

    for layer in params["layers"]:
        x2 = h                                           # (B*S, H) bf16
        qkv = dense(x2, layer["qkv_w"], layer["qkv_b"])  # (B*S, 3H) bf16, fused QKV
        q = qkv[:, :H].reshape(B, S, H)
        k = qkv[:, H:2 * H].reshape(B, S, H)
        v = qkv[:, 2 * H:].reshape(B, S, H)
        attn = multihead_attention(q, k, v, mask_bias, n_heads=n_heads)
        attn_out = dense(attn.reshape(B * S, H), layer["ao_w"], layer["ao_b"])
        h1 = add_layernorm(attn_out, x2, layer["ln1_g"], layer["ln1_b"],
                           out_dtype=cdt)                # fused residual + LN
        inter = dense(h1, layer["i_w"], layer["i_b"], activation="gelu")
        out = dense(inter, layer["o_w"], layer["o_b"])
        h = add_layernorm(out, h1, layer["ln2_g"], layer["ln2_b"],
                          out_dtype=cdt)                 # fused residual + LN

    last_hidden = h.reshape(B, S, H).astype(jnp.float32)
    cls = last_hidden[:, 0, :].astype(cdt)               # (B, H)
    pooler_output = dense(cls, params["pool_w"], params["pool_b"],
                          activation="tanh", out_dtype=jnp.float32)
    return last_hidden, pooler_output


def bert_sentence_encoder_forward(params, inputs, cat_entity_rep=False, cat=True):
    """Mirrors BERTSentenceEncoder.forward semantics."""
    last_hidden, pooler_output = bert_forward(params, inputs["word"], inputs["mask"])
    if not cat_entity_rep:
        return pooler_output
    if cat:
        tensor_range = jnp.arange(inputs["word"].shape[0])
        h_state = last_hidden[tensor_range, inputs["pos1"]]     # (B, hidden)
        t_state = last_hidden[tensor_range, inputs["pos2"]]     # (B, hidden)
        return h_state, t_state, last_hidden
    return pooler_output, last_hidden


# ----------------------------------------------------------------------------
# Demo
# ----------------------------------------------------------------------------

if __name__ == "__main__":
    B, S = 2, 16
    VOCAB, HIDDEN, N_HEADS, INTER, N_LAYERS, MAX_POS = 30, 64, 4, 128, 2, 32

    key = jax.random.PRNGKey(0)
    kp, kw = jax.random.split(key)
    params = init_bert_params(kp, vocab_size=VOCAB, hidden=HIDDEN,
                              n_layers=N_LAYERS, n_heads=N_HEADS,
                              intermediate=INTER, max_pos=MAX_POS)

    word = jax.random.randint(kw, (B, S), 0, VOCAB, dtype=jnp.int32)
    # valid lengths 10 and 13 -> attention mask
    lengths = jnp.array([10, 13], dtype=jnp.int32)
    mask = (jnp.arange(S)[None, :] < lengths[:, None]).astype(jnp.int32)
    pos1 = jnp.array([2, 3], dtype=jnp.int32)
    pos2 = jnp.array([5, 7], dtype=jnp.int32)
    inputs = {"word": word, "mask": mask, "pos1": pos1, "pos2": pos2}

    # Branch 1: cat_entity_rep=False -> pooler output
    pooler = bert_sentence_encoder_forward(params, inputs, cat_entity_rep=False)
    pooler = jax.block_until_ready(pooler)
    assert pooler.shape == (B, HIDDEN)
    assert bool(jnp.all(jnp.isfinite(pooler)))

    # Branch 2: cat_entity_rep=True, cat=True -> (h_state, t_state, last_hidden)
    h_state, t_state, last_hidden = bert_sentence_encoder_forward(
        params, inputs, cat_entity_rep=True, cat=True)
    jax.block_until_ready((h_state, t_state, last_hidden))
    assert h_state.shape == (B, HIDDEN)
    assert t_state.shape == (B, HIDDEN)
    assert last_hidden.shape == (B, S, HIDDEN)

    print("KERNEL_OK")
</pallas_src>

<mosaic_0001>
module attributes {stable_mosaic.version = 11 : i64} {
  func.func @_layernorm_kernel(%arg0: i32, %arg1: memref<32x64xf32, #tpu.memory_space<vmem>>, %arg2: memref<1x64xf32, #tpu.memory_space<vmem>>, %arg3: memref<1x64xf32, #tpu.memory_space<vmem>>, %arg4: memref<32x64xbf16, #tpu.memory_space<vmem>>) attributes {dimension_semantics = [#tpu.dimension_semantics<parallel>], iteration_bounds = array<i64: 1>, scalar_prefetch = 0 : i64, scratch_operands = 0 : i64, tpu.core_type = #tpu.core_type<tc>, window_params = [{transform_indices = @transform_0, window_bounds = array<i64: 32, 64>}, {pipeline_mode = #tpu.pipeline_mode<synchronous>, transform_indices = @transform_1, window_bounds = array<i64: 1, 64>}, {pipeline_mode = #tpu.pipeline_mode<synchronous>, transform_indices = @transform_2, window_bounds = array<i64: 1, 64>}, {transform_indices = @transform_3, window_bounds = array<i64: 32, 64>}]} {
    %c0 = arith.constant 0 : index
    %c0_0 = arith.constant 0 : index
    %0 = vector.load %arg1[%c0, %c0_0] : memref<32x64xf32, #tpu.memory_space<vmem>>, vector<32x64xf32>
    %cst = arith.constant dense<0.000000e+00> : vector<32xf32>
    %1 = vector.multi_reduction <add>, %0, %cst [1] : vector<32x64xf32> to vector<32xf32>
    %2 = vector.shape_cast %1 : vector<32xf32> to vector<32x1xf32>
    %cst_1 = arith.constant 6.400000e+01 : f32
    %3 = vector.broadcast %cst_1 : f32 to vector<32x1xf32>
    %4 = arith.divf %2, %3 : vector<32x1xf32>
    %5 = vector.broadcast %4 : vector<32x1xf32> to vector<32x64xf32>
    %6 = arith.subf %0, %5 : vector<32x64xf32>
    %7 = arith.mulf %6, %6 : vector<32x64xf32>
    %cst_2 = arith.constant dense<0.000000e+00> : vector<32xf32>
    %8 = vector.multi_reduction <add>, %7, %cst_2 [1] : vector<32x64xf32> to vector<32xf32>
    %9 = vector.shape_cast %8 : vector<32xf32> to vector<32x1xf32>
    %cst_3 = arith.constant 6.400000e+01 : f32
    %10 = vector.broadcast %cst_3 : f32 to vector<32x1xf32>
    %11 = arith.divf %9, %10 : vector<32x1xf32>
    %12 = vector.broadcast %4 : vector<32x1xf32> to vector<32x64xf32>
    %13 = arith.subf %0, %12 : vector<32x64xf32>
    %cst_4 = arith.constant 9.99999996E-13 : f32
    %14 = vector.broadcast %cst_4 : f32 to vector<32x1xf32>
    %15 = arith.addf %11, %14 : vector<32x1xf32>
    %16 = math.rsqrt %15 : vector<32x1xf32>
    %17 = vector.broadcast %16 : vector<32x1xf32> to vector<32x64xf32>
    %18 = arith.mulf %13, %17 : vector<32x64xf32>
    %c0_5 = arith.constant 0 : index
    %c0_6 = arith.constant 0 : index
    %19 = vector.load %arg2[%c0_5, %c0_6] : memref<1x64xf32, #tpu.memory_space<vmem>>, vector<1x64xf32>
    %20 = vector.broadcast %19 : vector<1x64xf32> to vector<32x64xf32>
    %21 = arith.mulf %18, %20 : vector<32x64xf32>
    %c0_7 = arith.constant 0 : index
    %c0_8 = arith.constant 0 : index
    %22 = vector.load %arg3[%c0_7, %c0_8] : memref<1x64xf32, #tpu.memory_space<vmem>>, vector<1x64xf32>
    %23 = vector.broadcast %22 : vector<1x64xf32> to vector<32x64xf32>
    %24 = arith.addf %21, %23 : vector<32x64xf32>
    %25 = arith.truncf %24 : vector<32x64xf32> to vector<32x64xbf16>
    %c0_9 = arith.constant 0 : index
    %c0_10 = arith.constant 0 : index
    %26 = vector.load %arg4[%c0_9, %c0_10] : memref<32x64xbf16, #tpu.memory_space<vmem>>, vector<32x64xbf16>
    tpu.vector_store %arg4[%c0_9, %c0_10], %25 {strides = array<i32>} : memref<32x64xbf16, #tpu.memory_space<vmem>>, vector<32x64xbf16>,
    return
  }
  func.func @transform_0(%arg0: i32) -> (i32, i32) {
    %c0_i32 = arith.constant 0 : i32
    %c0_i32_0 = arith.constant 0 : i32
    return %arg0, %c0_i32 : i32, i32
  }
  func.func @transform_1(%arg0: i32) -> (i32, i32) {
    %c0_i32 = arith.constant 0 : i32
    %c0_i32_0 = arith.constant 0 : i32
    %c0_i32_1 = arith.constant 0 : i32
    return %c0_i32, %c0_i32_0 : i32, i32
  }
  func.func @transform_2(%arg0: i32) -> (i32, i32) {
    %c0_i32 = arith.constant 0 : i32
    %c0_i32_0 = arith.constant 0 : i32
    %c0_i32_1 = arith.constant 0 : i32
    return %c0_i32, %c0_i32_0 : i32, i32
  }
  func.func @transform_3(%arg0: i32) -> (i32, i32) {
    %c0_i32 = arith.constant 0 : i32
    %c0_i32_0 = arith.constant 0 : i32
    return %arg0, %c0_i32 : i32, i32
  }
}

</mosaic_0001>

<llo_original>
// kernel: tpu_custom_call.1
$region0: #{tpu_custom_call.1}
  #allocation0 [shape = 'u32[]', space=smem, size = 0x4, offset = 0x4, fixed_abs, tag = 'smem constant byte address 0x4 - core index']
  #allocation1 [shape = 'u32[144,128]{1,0:T(1,128)}', space=vmem, size = 0x12000, scoped, tag = 'internal scratch']
  %s0 = inlined_call_operand.hbm [shape: f32[32,64], index: 0, kind: input, shape index: {}]
  %s1 = inlined_call_operand.vmem [shape: f32[1,64], index: 1, kind: input, shape index: {}]
  %s2 = inlined_call_operand.vmem [shape: f32[1,64], index: 2, kind: input, shape index: {}]
  %s3 = inlined_call_operand.hbm [shape: bf16[32,64], index: 3, kind: output, shape index: {}]
  %s4 = sld [smem:[#allocation0]]
  $region26: #{tpu_custom_call.1} parent=0
    _
  %s6 = ssub.s32 1, %s4
  %s7 = scalar_select 0, %s6, %s4
  $region1: #{tpu_custom_call.1} parent=0
    #allocation2 [shape = 'u8[16384]{0}', space=vmem, size = 0x4000, scoped, tag = 'input window, operand 0, single buffered']
    #allocation3 [shape = 's32[1]{0}', space=sflag, size = 0x4, scoped, tag = 'scoped memory for tpu_custom_call.1']
    #allocation4 [shape = 's32[1]{0}', space=sflag, size = 0x4, scoped, tag = 'scoped memory for tpu_custom_call.1']
    #allocation5 [shape = 'u8[8192]{0}', space=vmem, size = 0x2000, scoped, tag = 'output window, operand 0, single buffered']
    %8 = vsyncpa [#allocation3], 0
    %9 = vsyncpa [#allocation4], 0
    // Predicated region
    $region2: #{tpu_custom_call.1} parent=1 // pred_check
      _
    $region3: #{tpu_custom_call.1} parent=1 // pred_check_branch
      %11 = sbr.rel (0) target = $region5
    $region4: #{tpu_custom_call.1} parent=1 // pred_region
      %s13 = ssub.s32 512, 512
      %14 = vsyncadd [#allocation3], %s13
      %s15 = sshll.u32 [#allocation2], 4
      %s16 = int_to_ptr.vmem [resolvable:$true] %s15
      %21 = dma.hbm_to_vmem [thread:$0]  %s0, 512, %s16, [#allocation3], 128, 128, 8
    $region5: #{tpu_custom_call.1} parent=1 // pred_fallthru
      _
    // Predicated region
    $region6: #{tpu_custom_call.1} parent=1 // pred_check
      _
    $region7: #{tpu_custom_call.1} parent=1 // pred_check_branch
      %23 = sbr.rel (0) target = $region9
    $region8: #{tpu_custom_call.1} parent=1 // pred_region
      _
    $region9: #{tpu_custom_call.1} parent=1 // pred_fallthru
      _
    // Predicated region
    $region10: #{tpu_custom_call.1} parent=1 // pred_check
      _
    $region11: #{tpu_custom_call.1} parent=1 // pred_check_branch
      %25 = sbr.rel (0) target = $region13
    $region12: #{tpu_custom_call.1} parent=1 // pred_region
      _
    $region13: #{tpu_custom_call.1} parent=1 // pred_fallthru
      _
    // Predicated region
    $region14: #{tpu_custom_call.1} parent=1 // pred_check
      _
    $region15: #{tpu_custom_call.1} parent=1 // pred_check_branch
      %27 = sbr.rel (0) target = $region17
    $region16: #{tpu_custom_call.1} parent=1 // pred_region
      %28 = dma.done [#allocation3], 512
    $region17: #{tpu_custom_call.1} parent=1 // pred_fallthru
      _
    %v29 = vld [vmem:[#allocation2] sm:$0xff]
    %v30 = vld [vmem:[#allocation2 + $0x8] sm:$0xff]
    %v31 = vld [vmem:[#allocation2 + $0x10] sm:$0xff]
    %v32 = vld [vmem:[#allocation2 + $0x18] sm:$0xff]
    %vm33 = vcmask 523264
    %v34 = vsel %vm33, %v29, 0.0
    %35 = vadd.xlane.f32.xlu0 %v34
    %v36 = vpop.xlane.xlu0 %35
    %v37 = vsel %vm33, %v30, 0.0
    %38 = vadd.xlane.f32.xlu0 %v37
    %v39 = vpop.xlane.xlu0 %38
    %v40 = vsel %vm33, %v31, 0.0
    %41 = vadd.xlane.f32.xlu0 %v40
    %v42 = vpop.xlane.xlu0 %41
    %v43 = vsel %vm33, %v32, 0.0
    %44 = vadd.xlane.f32.xlu0 %v43
    %v45 = vpop.xlane.xlu0 %44
    %v46 = vrcp.pop 64.0
    %v47 = vmul.f32 %v36, %v46
    %v48 = vmul.f32 %v39, %v46
    %v49 = vmul.f32 %v42, %v46
    %v50 = vmul.f32 %v45, %v46
    %v51 = vsub.f32 %v29, %v47
    %v52 = vsub.f32 %v30, %v48
    %v53 = vsub.f32 %v31, %v49
    %v54 = vsub.f32 %v32, %v50
    %v55 = vmul.f32 %v51, %v51
    %v56 = vmul.f32 %v52, %v52
    %v57 = vmul.f32 %v53, %v53
    %v58 = vmul.f32 %v54, %v54
    %v59 = vsel %vm33, %v55, 0.0
    %60 = vadd.xlane.f32.xlu0 %v59
    %v61 = vpop.xlane.xlu0 %60
    %v62 = vsel %vm33, %v56, 0.0
    %63 = vadd.xlane.f32.xlu0 %v62
    %v64 = vpop.xlane.xlu0 %63
    %v65 = vsel %vm33, %v57, 0.0
    %66 = vadd.xlane.f32.xlu0 %v65
    %v67 = vpop.xlane.xlu0 %66
    %v68 = vsel %vm33, %v58, 0.0
    %69 = vadd.xlane.f32.xlu0 %v68
    %v70 = vpop.xlane.xlu0 %69
    %v71 = vmul.f32 %v61, %v46
    %v72 = vmul.f32 %v64, %v46
    %v73 = vmul.f32 %v67, %v46
    %v74 = vmul.f32 %v70, %v46
    %v75 = vadd.f32 %v71, 1e-12
    %v76 = vadd.f32 %v72, 1e-12
    %v77 = vadd.f32 %v73, 1e-12
    %v78 = vadd.f32 %v74, 1e-12
    %v79 = vrsqrt.pop %v75
    %v80 = vrsqrt.pop %v76
    %v81 = vrsqrt.pop %v77
    %v82 = vrsqrt.pop %v78
    %v83 = vmul.f32 %v51, %v79
    %v84 = vmul.f32 %v52, %v80
    %v85 = vmul.f32 %v53, %v81
    %v86 = vmul.f32 %v54, %v82
    %v87 = vld [vmem:[%s1] sm:$0x1]
    %v89 = vlaneseq
    %v90 = vshrl.u32 %v89, 7
    %v91 = vsub.s32 0, %v90
    %v92 = vrot.slane %v87, %v91
    %v94 = vmul.f32 %v83, %v92
    %v95 = vmul.f32 %v84, %v92
    %v96 = vmul.f32 %v85, %v92
    %v97 = vmul.f32 %v86, %v92
    %v98 = vld [vmem:[%s2] sm:$0x1]
    %v100 = vlaneseq
    %v101 = vshrl.u32 %v100, 7
    %v102 = vsub.s32 0, %v101
    %v103 = vrot.slane %v98, %v102
    %v105 = vadd.f32 %v94, %v103
    %v106 = vadd.f32 %v95, %v103
    %v107 = vadd.f32 %v96, %v103
    %v108 = vadd.f32 %v97, %v103
    %v109 = vpack.c.bf16 %v106, %v105
    %v110 = vpack.c.bf16 %v108, %v107
    %v113 = vunpack.c.l.b16 %v109
    %v114 = vunpack.c.h.b16 %v109
    %v115 = vunpack.c.l.b16 %v110
    %v116 = vunpack.c.h.b16 %v110
    %v117 = vpack.c.b16 %v113, %v113
    %v118 = vpack.c.b16 %v114, %v114
    %v119 = vpack.c.b16 %v115, %v115
    %v120 = vpack.c.b16 %v116, %v116
    %vm125 = vcmask 519168
    %126 = vst.msk [vmem:[#allocation5] sm:$0xf] %vm125, %v117
    %127 = vst.msk [vmem:[#allocation5 + $0x4] sm:$0xf] %vm125, %v118
    %128 = vst.msk [vmem:[#allocation5 + $0x8] sm:$0xf] %vm125, %v119
    %129 = vst.msk [vmem:[#allocation5 + $0xc] sm:$0xf] %vm125, %v120
    // Predicated region
    $region18: #{tpu_custom_call.1} parent=1 // pred_check
      _
    $region19: #{tpu_custom_call.1} parent=1 // pred_check_branch
      %131 = sbr.rel (0) target = $region21
    $region20: #{tpu_custom_call.1} parent=1 // pred_region
      %s133 = ssub.s32 256, 256
      %134 = vsyncadd [#allocation4], %s133
      %s135 = sshll.u32 [#allocation5], 4
      %s136 = int_to_ptr.vmem [resolvable:$true] %s135
      %141 = dma.vmem_to_hbm [thread:$0]  %s136, 256, %s3, [#allocation4], 64, 64, 4
    $region21: #{tpu_custom_call.1} parent=1 // pred_fallthru
      _
    // Predicated region
    $region22: #{tpu_custom_call.1} parent=1 // pred_check
      _
    $region23: #{tpu_custom_call.1} parent=1 // pred_check_branch
      %143 = sbr.rel (0) target = $region25
    $region24: #{tpu_custom_call.1} parent=1 // pred_region
      %144 = dma.done [#allocation4], 256
    $region25: #{tpu_custom_call.1} parent=1 // pred_fallthru
      _
    %145 = vsyncpa [#allocation3], 1
    %146 = vsyncpa [#allocation4], 1

</llo_original>
